<compile_context>
chip_gen: v7x
topology: tpu7x:2x2x1
jax: 0.10.0
libtpu: 0.0.40
codegen_flags: <defaults>
</compile_context>

<pallas_src>
import jax
import jax.numpy as jnp
from jax.experimental import pallas as pl
from jax.experimental.pallas import tpu as pltpu


def dqn_mlp_kernel(xT_ref,
                   w1_ref, b1_ref,
                   w2_ref, b2_ref,
                   w3_ref, b3_ref,
                   w4_ref, b4_ref,
                   oT_ref):
    x = xT_ref[...]                                                   # (11, T)

    h = jnp.dot(w1_ref[...], x, preferred_element_type=jnp.float32) + b1_ref[...]
    h = jnp.maximum(h, 0.0)                                           # (L1, T)

    h = jnp.dot(w2_ref[...], h, preferred_element_type=jnp.float32) + b2_ref[...]
    h = jnp.maximum(h, 0.0)                                           # (L2, T)

    h = jnp.dot(w3_ref[...], h, preferred_element_type=jnp.float32) + b3_ref[...]
    h = jnp.maximum(h, 0.0)                                           # (L3, T)

    logits = jnp.dot(w4_ref[...], h,
                     preferred_element_type=jnp.float32) + b4_ref[...]  # (3, T)

    # Numerically stable softmax over the 3 action rows (sublane axis).
    # Unrolled 3-way max/add -> stays on the VPU, no XLU reduction; exact
    # division so every output column sums to 1 to f32 rounding.
    l0, l1, l2 = logits[0:1, :], logits[1:2, :], logits[2:3, :]
    m = jnp.maximum(jnp.maximum(l0, l1), l2)                          # (1, T)
    e = jnp.exp(logits - m)                                           # (3, T)
    denom = e[0:1, :] + e[1:2, :] + e[2:3, :]                         # (1, T)
    oT_ref[...] = e / denom                                           # lane-dense store


def _round_up(n, m):
    return ((n + m - 1) // m) * m


def dqn_forward(x, params, max_tile_cols=2048):
    """DQNAgent.forward: (batch, 11) -> (batch, 3) softmax probabilities."""
    batch, feat = x.shape
    xT = x.T                                     # (11, batch): batch on lanes

    # Biggest lane tile that is a multiple of 128, capped so VMEM stays tiny
    # and huge replay batches still get >=2 parallel steps (v7x megacore).
    tile = min(max_tile_cols, _round_up(batch, 128))
    grid_n = pl.cdiv(batch, tile)

    operands = [
        xT,
        params["w1"], params["b1"],
        params["w2"], params["b2"],
        params["w3"], params["b3"],
        params["w4"], params["b4"],
    ]

    def batch_map(i):        # x / output: walk the batch (lane) axis
        return (0, i)

    def const_map(i):        # weights / biases: same block every step
        return (0, 0)

    in_specs = [pl.BlockSpec((feat, tile), batch_map)]
    for op in operands[1:]:
        in_specs.append(pl.BlockSpec(op.shape, const_map))

    outT = pl.pallas_call(
        dqn_mlp_kernel,
        out_shape=jax.ShapeDtypeStruct((3, batch), jnp.float32),
        grid=(grid_n,),
        in_specs=in_specs,
        out_specs=pl.BlockSpec((3, tile), batch_map),
        compiler_params=pltpu.CompilerParams(
            dimension_semantics=("parallel",)),
    )(*operands)
    return outT.T                                # (batch, 3)


def init_params(key, first_layer=32, second_layer=64, third_layer=32):
    """Deterministic synthetic init matching nn.Linear fan-in scaling.

    Weights are (out_features, in_features); biases are (out_features, 1).
    """
    sizes = [(first_layer, 11), (second_layer, first_layer),
             (third_layer, second_layer), (3, third_layer)]
    params = {}
    keys = jax.random.split(key, 2 * len(sizes))
    for i, (fan_out, fan_in) in enumerate(sizes):
        bound = float(fan_in) ** -0.5
        params[f"w{i+1}"] = jax.random.uniform(
            keys[2 * i], (fan_out, fan_in), jnp.float32, -bound, bound)
        params[f"b{i+1}"] = jax.random.uniform(
            keys[2 * i + 1], (fan_out, 1), jnp.float32, -bound, bound)
    return params


def reference_forward(x, params):
    """Plain-JAX reference of the same forward pass (PyTorch layout)."""
    h = x
    for i in range(1, 4):
        h = jnp.maximum(h @ params[f"w{i}"].T + params[f"b{i}"][:, 0], 0.0)
    logits = h @ params["w4"].T + params["b4"][:, 0]
    return jax.nn.softmax(logits, axis=-1)


# TODO(synk): training utilities (replay_new, train_short_memory, optimizer,
# memory deque, get_state/set_reward game logic, pandas bookkeeping) are
# host-side RL plumbing, not part of the forward pass, and are intentionally
# not translated to Pallas.

if __name__ == "__main__":
    key = jax.random.PRNGKey(0)
    pkey, xkey1, xkey2 = jax.random.split(key, 3)

    first_layer, second_layer, third_layer = 32, 64, 32
    params = init_params(pkey, first_layer, second_layer, third_layer)

    # 1) Single-step inference batch -> one grid step, partial (masked) tile.
    x_small = jax.random.normal(xkey1, (8, 11), dtype=jnp.float32)
    out_small = jax.block_until_ready(dqn_forward(x_small, params))
    ref_small = reference_forward(x_small, params)
    assert out_small.shape == (8, 3)
    assert jnp.allclose(jnp.sum(out_small, axis=-1), 1.0, atol=1e-3)
    assert jnp.allclose(out_small, ref_small, atol=2e-3, rtol=2e-3)

    # 2) Replay-buffer-sized batch, default tiling (single big lane tile).
    x_big = jax.random.normal(xkey2, (600, 11), dtype=jnp.float32)
    out_big = jax.block_until_ready(dqn_forward(x_big, params))
    ref_big = reference_forward(x_big, params)
    assert out_big.shape == (600, 3)
    assert jnp.allclose(jnp.sum(out_big, axis=-1), 1.0, atol=1e-3)
    assert jnp.allclose(out_big, ref_big, atol=2e-3, rtol=2e-3)

    # 3) Same batch with small tiles -> multi-step grid + masked last tile.
    out_tiled = jax.block_until_ready(
        dqn_forward(x_big, params, max_tile_cols=256))
    assert out_tiled.shape == (600, 3)
    assert jnp.allclose(jnp.sum(out_tiled, axis=-1), 1.0, atol=1e-3)
    assert jnp.allclose(out_tiled, ref_big, atol=2e-3, rtol=2e-3)

    print("KERNEL_OK")
</pallas_src>

<mosaic_0001>
module attributes {stable_mosaic.version = 11 : i64} {
  func.func @dqn_mlp_kernel(%arg0: i32, %arg1: memref<11x128xf32, #tpu.memory_space<vmem>>, %arg2: memref<32x11xf32, #tpu.memory_space<vmem>>, %arg3: memref<32x1xf32, #tpu.memory_space<vmem>>, %arg4: memref<64x32xf32, #tpu.memory_space<vmem>>, %arg5: memref<64x1xf32, #tpu.memory_space<vmem>>, %arg6: memref<32x64xf32, #tpu.memory_space<vmem>>, %arg7: memref<32x1xf32, #tpu.memory_space<vmem>>, %arg8: memref<3x32xf32, #tpu.memory_space<vmem>>, %arg9: memref<3x1xf32, #tpu.memory_space<vmem>>, %arg10: memref<3x128xf32, #tpu.memory_space<vmem>>) attributes {dimension_semantics = [#tpu.dimension_semantics<parallel>], iteration_bounds = array<i64: 1>, scalar_prefetch = 0 : i64, scratch_operands = 0 : i64, tpu.core_type = #tpu.core_type<tc>, window_params = [{transform_indices = @transform_0, window_bounds = array<i64: 11, 128>}, {pipeline_mode = #tpu.pipeline_mode<synchronous>, transform_indices = @transform_1, window_bounds = array<i64: 32, 11>}, {pipeline_mode = #tpu.pipeline_mode<synchronous>, transform_indices = @transform_2, window_bounds = array<i64: 32, 1>}, {pipeline_mode = #tpu.pipeline_mode<synchronous>, transform_indices = @transform_3, window_bounds = array<i64: 64, 32>}, {pipeline_mode = #tpu.pipeline_mode<synchronous>, transform_indices = @transform_4, window_bounds = array<i64: 64, 1>}, {pipeline_mode = #tpu.pipeline_mode<synchronous>, transform_indices = @transform_5, window_bounds = array<i64: 32, 64>}, {pipeline_mode = #tpu.pipeline_mode<synchronous>, transform_indices = @transform_6, window_bounds = array<i64: 32, 1>}, {pipeline_mode = #tpu.pipeline_mode<synchronous>, transform_indices = @transform_7, window_bounds = array<i64: 3, 32>}, {pipeline_mode = #tpu.pipeline_mode<synchronous>, transform_indices = @transform_8, window_bounds = array<i64: 3, 1>}, {transform_indices = @transform_9, window_bounds = array<i64: 3, 128>}]} {
    %c0 = arith.constant 0 : index
    %c0_0 = arith.constant 0 : index
    %0 = vector.load %arg1[%c0, %c0_0] : memref<11x128xf32, #tpu.memory_space<vmem>>, vector<11x128xf32>
    %c0_1 = arith.constant 0 : index
    %c0_2 = arith.constant 0 : index
    %1 = vector.load %arg2[%c0_1, %c0_2] : memref<32x11xf32, #tpu.memory_space<vmem>>, vector<32x11xf32>
    %cst = arith.constant dense<0.000000e+00> : vector<32x128xf32>
    %2 = tpu.matmul %1, %0, %cst {dimension_numbers = #tpu.dot_dimension_numbers<[1], [0], [0], [1], [0, 0, 1, 1], [], []>} : vector<32x11xf32>, vector<11x128xf32>, vector<32x128xf32> -> vector<32x128xf32>
    %c0_3 = arith.constant 0 : index
    %c0_4 = arith.constant 0 : index
    %3 = vector.load %arg3[%c0_3, %c0_4] : memref<32x1xf32, #tpu.memory_space<vmem>>, vector<32x1xf32>
    %4 = vector.broadcast %3 : vector<32x1xf32> to vector<32x128xf32>
    %5 = arith.addf %2, %4 : vector<32x128xf32>
    %cst_5 = arith.constant 0.000000e+00 : f32
    %6 = vector.broadcast %cst_5 : f32 to vector<32x128xf32>
    %7 = arith.maximumf %5, %6 : vector<32x128xf32>
    %c0_6 = arith.constant 0 : index
    %c0_7 = arith.constant 0 : index
    %8 = vector.load %arg4[%c0_6, %c0_7] : memref<64x32xf32, #tpu.memory_space<vmem>>, vector<64x32xf32>
    %cst_8 = arith.constant dense<0.000000e+00> : vector<64x128xf32>
    %9 = tpu.matmul %8, %7, %cst_8 {dimension_numbers = #tpu.dot_dimension_numbers<[1], [0], [0], [1], [0, 0, 1, 1], [], []>} : vector<64x32xf32>, vector<32x128xf32>, vector<64x128xf32> -> vector<64x128xf32>
    %c0_9 = arith.constant 0 : index
    %c0_10 = arith.constant 0 : index
    %10 = vector.load %arg5[%c0_9, %c0_10] : memref<64x1xf32, #tpu.memory_space<vmem>>, vector<64x1xf32>
    %11 = vector.broadcast %10 : vector<64x1xf32> to vector<64x128xf32>
    %12 = arith.addf %9, %11 : vector<64x128xf32>
    %cst_11 = arith.constant 0.000000e+00 : f32
    %13 = vector.broadcast %cst_11 : f32 to vector<64x128xf32>
    %14 = arith.maximumf %12, %13 : vector<64x128xf32>
    %c0_12 = arith.constant 0 : index
    %c0_13 = arith.constant 0 : index
    %15 = vector.load %arg6[%c0_12, %c0_13] : memref<32x64xf32, #tpu.memory_space<vmem>>, vector<32x64xf32>
    %cst_14 = arith.constant dense<0.000000e+00> : vector<32x128xf32>
    %16 = tpu.matmul %15, %14, %cst_14 {dimension_numbers = #tpu.dot_dimension_numbers<[1], [0], [0], [1], [0, 0, 1, 1], [], []>} : vector<32x64xf32>, vector<64x128xf32>, vector<32x128xf32> -> vector<32x128xf32>
    %c0_15 = arith.constant 0 : index
    %c0_16 = arith.constant 0 : index
    %17 = vector.load %arg7[%c0_15, %c0_16] : memref<32x1xf32, #tpu.memory_space<vmem>>, vector<32x1xf32>
    %18 = vector.broadcast %17 : vector<32x1xf32> to vector<32x128xf32>
    %19 = arith.addf %16, %18 : vector<32x128xf32>
    %cst_17 = arith.constant 0.000000e+00 : f32
    %20 = vector.broadcast %cst_17 : f32 to vector<32x128xf32>
    %21 = arith.maximumf %19, %20 : vector<32x128xf32>
    %c0_18 = arith.constant 0 : index
    %c0_19 = arith.constant 0 : index
    %22 = vector.load %arg8[%c0_18, %c0_19] : memref<3x32xf32, #tpu.memory_space<vmem>>, vector<3x32xf32>
    %cst_20 = arith.constant dense<0.000000e+00> : vector<3x128xf32>
    %23 = tpu.matmul %22, %21, %cst_20 {dimension_numbers = #tpu.dot_dimension_numbers<[1], [0], [0], [1], [0, 0, 1, 1], [], []>} : vector<3x32xf32>, vector<32x128xf32>, vector<3x128xf32> -> vector<3x128xf32>
    %c0_21 = arith.constant 0 : index
    %c0_22 = arith.constant 0 : index
    %24 = vector.load %arg9[%c0_21, %c0_22] : memref<3x1xf32, #tpu.memory_space<vmem>>, vector<3x1xf32>
    %25 = vector.broadcast %24 : vector<3x1xf32> to vector<3x128xf32>
    %26 = arith.addf %23, %25 : vector<3x128xf32>
    %27 = vector.extract_strided_slice %26 {offsets = [0, 0], sizes = [1, 128], strides = [1, 1]} : vector<3x128xf32> to vector<1x128xf32>
    %28 = vector.extract_strided_slice %26 {offsets = [1, 0], sizes = [1, 128], strides = [1, 1]} : vector<3x128xf32> to vector<1x128xf32>
    %29 = vector.extract_strided_slice %26 {offsets = [2, 0], sizes = [1, 128], strides = [1, 1]} : vector<3x128xf32> to vector<1x128xf32>
    %30 = arith.maximumf %27, %28 : vector<1x128xf32>
    %31 = arith.maximumf %30, %29 : vector<1x128xf32>
    %32 = vector.broadcast %31 : vector<1x128xf32> to vector<3x128xf32>
    %33 = arith.subf %26, %32 : vector<3x128xf32>
    %34 = math.exp %33 : vector<3x128xf32>
    %35 = vector.extract_strided_slice %34 {offsets = [0, 0], sizes = [1, 128], strides = [1, 1]} : vector<3x128xf32> to vector<1x128xf32>
    %36 = vector.extract_strided_slice %34 {offsets = [1, 0], sizes = [1, 128], strides = [1, 1]} : vector<3x128xf32> to vector<1x128xf32>
    %37 = arith.addf %35, %36 : vector<1x128xf32>
    %38 = vector.extract_strided_slice %34 {offsets = [2, 0], sizes = [1, 128], strides = [1, 1]} : vector<3x128xf32> to vector<1x128xf32>
    %39 = arith.addf %37, %38 : vector<1x128xf32>
    %40 = vector.broadcast %39 : vector<1x128xf32> to vector<3x128xf32>
    %41 = arith.divf %34, %40 : vector<3x128xf32>
    %c0_23 = arith.constant 0 : index
    %c0_24 = arith.constant 0 : index
    %42 = vector.load %arg10[%c0_23, %c0_24] : memref<3x128xf32, #tpu.memory_space<vmem>>, vector<3x128xf32>
    tpu.vector_store %arg10[%c0_23, %c0_24], %41 {strides = array<i32>} : memref<3x128xf32, #tpu.memory_space<vmem>>, vector<3x128xf32>,
    return
  }
  func.func @transform_0(%arg0: i32) -> (i32, i32) {
    %c0_i32 = arith.constant 0 : i32
    %c0_i32_0 = arith.constant 0 : i32
    return %c0_i32, %arg0 : i32, i32
  }
  func.func @transform_1(%arg0: i32) -> (i32, i32) {
    %c0_i32 = arith.constant 0 : i32
    %c0_i32_0 = arith.constant 0 : i32
    %c0_i32_1 = arith.constant 0 : i32
    return %c0_i32, %c0_i32_0 : i32, i32
  }
  func.func @transform_2(%arg0: i32) -> (i32, i32) {
    %c0_i32 = arith.constant 0 : i32
    %c0_i32_0 = arith.constant 0 : i32
    %c0_i32_1 = arith.constant 0 : i32
    return %c0_i32, %c0_i32_0 : i32, i32
  }
  func.func @transform_3(%arg0: i32) -> (i32, i32) {
    %c0_i32 = arith.constant 0 : i32
    %c0_i32_0 = arith.constant 0 : i32
    %c0_i32_1 = arith.constant 0 : i32
    return %c0_i32, %c0_i32_0 : i32, i32
  }
  func.func @transform_4(%arg0: i32) -> (i32, i32) {
    %c0_i32 = arith.constant 0 : i32
    %c0_i32_0 = arith.constant 0 : i32
    %c0_i32_1 = arith.constant 0 : i32
    return %c0_i32, %c0_i32_0 : i32, i32
  }
  func.func @transform_5(%arg0: i32) -> (i32, i32) {
    %c0_i32 = arith.constant 0 : i32
    %c0_i32_0 = arith.constant 0 : i32
    %c0_i32_1 = arith.constant 0 : i32
    return %c0_i32, %c0_i32_0 : i32, i32
  }
  func.func @transform_6(%arg0: i32) -> (i32, i32) {
    %c0_i32 = arith.constant 0 : i32
    %c0_i32_0 = arith.constant 0 : i32
    %c0_i32_1 = arith.constant 0 : i32
    return %c0_i32, %c0_i32_0 : i32, i32
  }
  func.func @transform_7(%arg0: i32) -> (i32, i32) {
    %c0_i32 = arith.constant 0 : i32
    %c0_i32_0 = arith.constant 0 : i32
    %c0_i32_1 = arith.constant 0 : i32
    return %c0_i32, %c0_i32_0 : i32, i32
  }
  func.func @transform_8(%arg0: i32) -> (i32, i32) {
    %c0_i32 = arith.constant 0 : i32
    %c0_i32_0 = arith.constant 0 : i32
    %c0_i32_1 = arith.constant 0 : i32
    return %c0_i32, %c0_i32_0 : i32, i32
  }
  func.func @transform_9(%arg0: i32) -> (i32, i32) {
    %c0_i32 = arith.constant 0 : i32
    %c0_i32_0 = arith.constant 0 : i32
    return %c0_i32, %arg0 : i32, i32
  }
}

</mosaic_0001>

<llo_original>
// kernel: tpu_custom_call.1
$region0: #{tpu_custom_call.1}
  #allocation0 [shape = 'u32[]', space=smem, size = 0x4, offset = 0x4, fixed_abs, tag = 'smem constant byte address 0x4 - core index']
  #allocation1 [shape = 'u32[144,128]{1,0:T(1,128)}', space=vmem, size = 0x12000, scoped, tag = 'internal scratch']
  %s0 = inlined_call_operand.vmem [shape: f32[11,8], index: 0, kind: input, shape index: {}]
  %s1 = inlined_call_operand.vmem [shape: f32[32,11], index: 1, kind: input, shape index: {}]
  %s2 = inlined_call_operand.vmem [shape: f32[32,1], index: 2, kind: input, shape index: {}]
  %s3 = inlined_call_operand.vmem [shape: f32[64,32], index: 3, kind: input, shape index: {}]
  %s4 = inlined_call_operand.vmem [shape: f32[64,1], index: 4, kind: input, shape index: {}]
  %s5 = inlined_call_operand.vmem [shape: f32[32,64], index: 5, kind: input, shape index: {}]
  %s6 = inlined_call_operand.vmem [shape: f32[32,1], index: 6, kind: input, shape index: {}]
  %s7 = inlined_call_operand.vmem [shape: f32[3,32], index: 7, kind: input, shape index: {}]
  %s8 = inlined_call_operand.vmem [shape: f32[3,1], index: 8, kind: input, shape index: {}]
  %s9 = inlined_call_operand.hbm [shape: f32[3,8], index: 9, kind: output, shape index: {}]
  %s10 = sld [smem:[#allocation0]]
  $region46: #{tpu_custom_call.1} parent=0
    _
  %s12 = ssub.s32 1, %s10
  %s13 = scalar_select 0, %s12, %s10
  $region1: #{tpu_custom_call.1} parent=0
    #allocation2 [shape = 'u8[2048]{0}', space=vmem, size = 0x800, scoped, tag = 'output window, operand 0, single buffered']
    #allocation3 [shape = 's32[1]{0}', space=sflag, size = 0x4, scoped, tag = 'scoped memory for tpu_custom_call.1']
    %14 = vsyncpa [#allocation3], 0
    // Predicated region
    $region2: #{tpu_custom_call.1} parent=1 // pred_check
      _
    $region3: #{tpu_custom_call.1} parent=1 // pred_check_branch
      %16 = sbr.rel (0) target = $region5
    $region4: #{tpu_custom_call.1} parent=1 // pred_region
      _
    $region5: #{tpu_custom_call.1} parent=1 // pred_fallthru
      _
    // Predicated region
    $region6: #{tpu_custom_call.1} parent=1 // pred_check
      _
    $region7: #{tpu_custom_call.1} parent=1 // pred_check_branch
      %18 = sbr.rel (0) target = $region9
    $region8: #{tpu_custom_call.1} parent=1 // pred_region
      _
    $region9: #{tpu_custom_call.1} parent=1 // pred_fallthru
      _
    // Predicated region
    $region10: #{tpu_custom_call.1} parent=1 // pred_check
      _
    $region11: #{tpu_custom_call.1} parent=1 // pred_check_branch
      %20 = sbr.rel (0) target = $region13
    $region12: #{tpu_custom_call.1} parent=1 // pred_region
      _
    $region13: #{tpu_custom_call.1} parent=1 // pred_fallthru
      _
    // Predicated region
    $region14: #{tpu_custom_call.1} parent=1 // pred_check
      _
    $region15: #{tpu_custom_call.1} parent=1 // pred_check_branch
      %22 = sbr.rel (0) target = $region17
    $region16: #{tpu_custom_call.1} parent=1 // pred_region
      _
    $region17: #{tpu_custom_call.1} parent=1 // pred_fallthru
      _
    // Predicated region
    $region18: #{tpu_custom_call.1} parent=1 // pred_check
      _
    $region19: #{tpu_custom_call.1} parent=1 // pred_check_branch
      %24 = sbr.rel (0) target = $region21
    $region20: #{tpu_custom_call.1} parent=1 // pred_region
      _
    $region21: #{tpu_custom_call.1} parent=1 // pred_fallthru
      _
    // Predicated region
    $region22: #{tpu_custom_call.1} parent=1 // pred_check
      _
    $region23: #{tpu_custom_call.1} parent=1 // pred_check_branch
      %26 = sbr.rel (0) target = $region25
    $region24: #{tpu_custom_call.1} parent=1 // pred_region
      _
    $region25: #{tpu_custom_call.1} parent=1 // pred_fallthru
      _
    // Predicated region
    $region26: #{tpu_custom_call.1} parent=1 // pred_check
      _
    $region27: #{tpu_custom_call.1} parent=1 // pred_check_branch
      %28 = sbr.rel (0) target = $region29
    $region28: #{tpu_custom_call.1} parent=1 // pred_region
      _
    $region29: #{tpu_custom_call.1} parent=1 // pred_fallthru
      _
    // Predicated region
    $region30: #{tpu_custom_call.1} parent=1 // pred_check
      _
    $region31: #{tpu_custom_call.1} parent=1 // pred_check_branch
      %30 = sbr.rel (0) target = $region33
    $region32: #{tpu_custom_call.1} parent=1 // pred_region
      _
    $region33: #{tpu_custom_call.1} parent=1 // pred_fallthru
      _
    // Predicated region
    $region34: #{tpu_custom_call.1} parent=1 // pred_check
      _
    $region35: #{tpu_custom_call.1} parent=1 // pred_check_branch
      %32 = sbr.rel (0) target = $region37
    $region36: #{tpu_custom_call.1} parent=1 // pred_region
      _
    $region37: #{tpu_custom_call.1} parent=1 // pred_fallthru
      _
    %v33 = vld [vmem:[%s0] sm:$0xff]
    %v34 = vld [vmem:[%s0 + $0x8] sm:$0x7]
    %v35 = vld [vmem:[%s1] sm:$0xff]
    %v36 = vld [vmem:[%s1 + $0x8] sm:$0xff]
    %v37 = vld [vmem:[%s1 + $0x10] sm:$0xff]
    %v38 = vld [vmem:[%s1 + $0x18] sm:$0xff]
    %v39 = vld [vmem:[%s2] sm:$0xff]
    %v40 = vld [vmem:[%s2 + $0x8] sm:$0xff]
    %v41 = vld [vmem:[%s2 + $0x10] sm:$0xff]
    %v42 = vld [vmem:[%s2 + $0x18] sm:$0xff]
    %44 = vset.pattern.permute.xlu0 0
    %45 = vperm.xlu0 %44, %v39
    %v46 = vpop.permute.xlu0 %45
    %49 = vset.pattern.permute.xlu0 0
    %50 = vperm.xlu0 %49, %v40
    %v51 = vpop.permute.xlu0 %50
    %54 = vset.pattern.permute.xlu0 0
    %55 = vperm.xlu0 %54, %v41
    %v56 = vpop.permute.xlu0 %55
    %59 = vset.pattern.permute.xlu0 0
    %60 = vperm.xlu0 %59, %v42
    %v61 = vpop.permute.xlu0 %60
    %vm63 = vcmask 89088
    %v65 = vsel %vm63, %v35, 0
    %v68 = vsel %vm63, %v36, 0
    %v71 = vsel %vm63, %v37, 0
    %v74 = vsel %vm63, %v38, 0
    %vm76 = vcmask 1042432
    %v78 = vsel %vm76, %v34, 0
    %80 = vmatprep.subr.mxu0 0.0
    %81 = vmatpush1.msra.mxu0 %v33
    %82 = vmatprep.subr.mxu0 0.0
    %83 = vmatpush1.msra.mxu0 %v78
    %84 = vmatprep.subr.mxu0 0.0
    %85 = vmatpush1.msra.mxu0 0.0
    %86 = vmatprep.subr.mxu0 0.0
    %87 = vmatpush1.msra.mxu0 0.0
    %88 = vmatprep.subr.mxu0 0.0
    %89 = vmatpush1.msra.mxu0 0.0
    %90 = vmatprep.subr.mxu0 0.0
    %91 = vmatpush1.msra.mxu0 0.0
    %92 = vmatprep.subr.mxu0 0.0
    %93 = vmatpush1.msra.mxu0 0.0
    %94 = vmatprep.subr.mxu0 0.0
    %95 = vmatpush1.msra.mxu0 0.0
    %96 = vmatprep.subr.mxu0 0.0
    %97 = vmatpush1.msra.mxu0 0.0
    %98 = vmatprep.subr.mxu0 0.0
    %99 = vmatpush1.msra.mxu0 0.0
    %100 = vmatprep.subr.mxu0 0.0
    %101 = vmatpush1.msra.mxu0 0.0
    %102 = vmatprep.subr.mxu0 0.0
    %103 = vmatpush1.msra.mxu0 0.0
    %104 = vmatprep.subr.mxu0 0.0
    %105 = vmatpush1.msra.mxu0 0.0
    %106 = vmatprep.subr.mxu0 0.0
    %107 = vmatpush1.msra.mxu0 0.0
    %108 = vmatprep.subr.mxu0 0.0
    %109 = vmatpush1.msra.mxu0 0.0
    %110 = vmatprep.subr.mxu0 0.0
    %111 = vmatpush1.msra.mxu0 0.0
    %112 = vmatprep.subr.mxu0 0.0
    %113 = vmatpush1.msra.mxu0 0.0
    %114 = vmatprep.subr.mxu0 0.0
    %115 = vmatpush1.msra.mxu0 0.0
    %116 = vmatprep.subr.mxu0 0.0
    %117 = vmatpush1.msra.mxu0 0.0
    %118 = vmatprep.subr.mxu0 0.0
    %119 = vmatpush1.msra.mxu0 0.0
    %120 = vmatprep.subr.mxu0 0.0
    %121 = vmatpush1.msra.mxu0 0.0
    %122 = vmatprep.subr.mxu0 0.0
    %123 = vmatpush1.msra.mxu0 0.0
    %124 = vmatprep.subr.mxu0 0.0
    %125 = vmatpush1.msra.mxu0 0.0
    %126 = vmatprep.subr.mxu0 0.0
    %127 = vmatpush1.msra.mxu0 0.0
    %128 = vmatprep.subr.mxu0 0.0
    %129 = vmatpush1.msra.mxu0 0.0
    %130 = vmatprep.subr.mxu0 0.0
    %131 = vmatpush1.msra.mxu0 0.0
    %132 = vmatprep.subr.mxu0 0.0
    %133 = vmatpush1.msra.mxu0 0.0
    %134 = vmatprep.subr.mxu0 0.0
    %135 = vmatpush1.msra.mxu0 0.0
    %136 = vmatprep.subr.mxu0 0.0
    %137 = vmatpush1.msra.mxu0 0.0
    %138 = vmatprep.subr.mxu0 0.0
    %139 = vmatpush1.msra.mxu0 0.0
    %140 = vmatprep.subr.mxu0 0.0
    %141 = vmatpush1.msra.mxu0 0.0
    %142 = vmatprep.subr.mxu0 0.0
    %143 = vmatpush1.msra.mxu0 0.0
    %144 = vmatprep.mubr.f32.mxu0 0.0
    %145 = vmatmul.mubr.f32.gmra.mrb[0].mxu0 %v65
    %v146 = vpop.f32.mrb[0].mxu0
    %v147 = vadd.f32 %v46, %v146
    %v148 = vpop.f32.mrb[0].mxu0
    %149 = vmatprep.mubr.f32.mxu0 0.0
    %150 = vmatmul.mubr.f32.gmra.mrb[0].mxu0 %v68
    %v151 = vpop.f32.mrb[0].mxu0
    %v152 = vadd.f32 %v51, %v151
    %v153 = vpop.f32.mrb[0].mxu0
    %154 = vmatprep.mubr.f32.mxu0 0.0
    %155 = vmatmul.mubr.f32.gmra.mrb[0].mxu0 %v71
    %v156 = vpop.f32.mrb[0].mxu0
    %v157 = vadd.f32 %v56, %v156
    %v158 = vpop.f32.mrb[0].mxu0
    %159 = vmatprep.mubr.f32.mxu0 0.0
    %160 = vmatmul.mubr.f32.gmra.mrb[0].mxu0 %v74
    %v161 = vpop.f32.mrb[0].mxu0
    %v162 = vadd.f32 %v61, %v161
    %v163 = vpop.f32.mrb[0].mxu0
    %164 = vdwg.mxu0
    %v165 = vmax.f32 %v147, 0.0
    %v166 = vmax.f32 %v152, 0.0
    %v167 = vmax.f32 %v157, 0.0
    %v168 = vmax.f32 %v162, 0.0
    %v169 = vld [vmem:[%s3] sm:$0xff]
    %v170 = vld [vmem:[%s3 + $0x8] sm:$0xff]
    %v171 = vld [vmem:[%s3 + $0x10] sm:$0xff]
    %v172 = vld [vmem:[%s3 + $0x18] sm:$0xff]
    %v173 = vld [vmem:[%s3 + $0x20] sm:$0xff]
    %v174 = vld [vmem:[%s3 + $0x28] sm:$0xff]
    %v175 = vld [vmem:[%s3 + $0x30] sm:$0xff]
    %v176 = vld [vmem:[%s3 + $0x38] sm:$0xff]
    %v177 = vld [vmem:[%s4] sm:$0xff]
    %v178 = vld [vmem:[%s4 + $0x8] sm:$0xff]
    %v179 = vld [vmem:[%s4 + $0x10] sm:$0xff]
    %v180 = vld [vmem:[%s4 + $0x18] sm:$0xff]
    %v181 = vld [vmem:[%s4 + $0x20] sm:$0xff]
    %v182 = vld [vmem:[%s4 + $0x28] sm:$0xff]
    %v183 = vld [vmem:[%s4 + $0x30] sm:$0xff]
    %v184 = vld [vmem:[%s4 + $0x38] sm:$0xff]
    %186 = vset.pattern.permute.xlu0 0
    %187 = vperm.xlu0 %186, %v177
    %v188 = vpop.permute.xlu0 %187
    %191 = vset.pattern.permute.xlu0 0
    %192 = vperm.xlu0 %191, %v178
    %v193 = vpop.permute.xlu0 %192
    %196 = vset.pattern.permute.xlu0 0
    %197 = vperm.xlu0 %196, %v179
    %v198 = vpop.permute.xlu0 %197
    %201 = vset.pattern.permute.xlu0 0
    %202 = vperm.xlu0 %201, %v180
    %v203 = vpop.permute.xlu0 %202
    %206 = vset.pattern.permute.xlu0 0
    %207 = vperm.xlu0 %206, %v181
    %v208 = vpop.permute.xlu0 %207
    %211 = vset.pattern.permute.xlu0 0
    %212 = vperm.xlu0 %211, %v182
    %v213 = vpop.permute.xlu0 %212
    %216 = vset.pattern.permute.xlu0 0
    %217 = vperm.xlu0 %216, %v183
    %v218 = vpop.permute.xlu0 %217
    %221 = vset.pattern.permute.xlu0 0
    %222 = vperm.xlu0 %221, %v184
    %v223 = vpop.permute.xlu0 %222
    %vm225 = vcmask 261120
    %v227 = vsel %vm225, %v169, 0
    %v230 = vsel %vm225, %v170, 0
    %v233 = vsel %vm225, %v171, 0
    %v236 = vsel %vm225, %v172, 0
    %v239 = vsel %vm225, %v173, 0
    %v242 = vsel %vm225, %v174, 0
    %v245 = vsel %vm225, %v175, 0
    %v248 = vsel %vm225, %v176, 0
    %250 = vmatprep.subr.mxu0 0.0
    %251 = vmatpush1.msra.mxu0 %v165
    %252 = vmatprep.subr.mxu0 0.0
    %253 = vmatpush1.msra.mxu0 %v166
    %254 = vmatprep.subr.mxu0 0.0
    %255 = vmatpush1.msra.mxu0 %v167
    %256 = vmatprep.subr.mxu0 0.0
    %257 = vmatpush1.msra.mxu0 %v168
    %258 = vmatprep.subr.mxu0 0.0
    %259 = vmatpush1.msra.mxu0 0.0
    %260 = vmatprep.subr.mxu0 0.0
    %261 = vmatpush1.msra.mxu0 0.0
    %262 = vmatprep.subr.mxu0 0.0
    %263 = vmatpush1.msra.mxu0 0.0
    %264 = vmatprep.subr.mxu0 0.0
    %265 = vmatpush1.msra.mxu0 0.0
    %266 = vmatprep.subr.mxu0 0.0
    %267 = vmatpush1.msra.mxu0 0.0
    %268 = vmatprep.subr.mxu0 0.0
    %269 = vmatpush1.msra.mxu0 0.0
    %270 = vmatprep.subr.mxu0 0.0
    %271 = vmatpush1.msra.mxu0 0.0
    %272 = vmatprep.subr.mxu0 0.0
    %273 = vmatpush1.msra.mxu0 0.0
    %274 = vmatprep.subr.mxu0 0.0
    %275 = vmatpush1.msra.mxu0 0.0
    %276 = vmatprep.subr.mxu0 0.0
    %277 = vmatpush1.msra.mxu0 0.0
    %278 = vmatprep.subr.mxu0 0.0
    %279 = vmatpush1.msra.mxu0 0.0
    %280 = vmatprep.subr.mxu0 0.0
    %281 = vmatpush1.msra.mxu0 0.0
    %282 = vmatprep.subr.mxu0 0.0
    %283 = vmatpush1.msra.mxu0 0.0
    %284 = vmatprep.subr.mxu0 0.0
    %285 = vmatpush1.msra.mxu0 0.0
    %286 = vmatprep.subr.mxu0 0.0
    %287 = vmatpush1.msra.mxu0 0.0
    %288 = vmatprep.subr.mxu0 0.0
    %289 = vmatpush1.msra.mxu0 0.0
    %290 = vmatprep.subr.mxu0 0.0
    %291 = vmatpush1.msra.mxu0 0.0
    %292 = vmatprep.subr.mxu0 0.0
    %293 = vmatpush1.msra.mxu0 0.0
    %294 = vmatprep.subr.mxu0 0.0
    %295 = vmatpush1.msra.mxu0 0.0
    %296 = vmatprep.subr.mxu0 0.0
    %297 = vmatpush1.msra.mxu0 0.0
    %298 = vmatprep.subr.mxu0 0.0
    %299 = vmatpush1.msra.mxu0 0.0
    %300 = vmatprep.subr.mxu0 0.0
    %301 = vmatpush1.msra.mxu0 0.0
    %302 = vmatprep.subr.mxu0 0.0
    %303 = vmatpush1.msra.mxu0 0.0
    %304 = vmatprep.subr.mxu0 0.0
    %305 = vmatpush1.msra.mxu0 0.0
    %306 = vmatprep.subr.mxu0 0.0
    %307 = vmatpush1.msra.mxu0 0.0
    %308 = vmatprep.subr.mxu0 0.0
    %309 = vmatpush1.msra.mxu0 0.0
    %310 = vmatprep.subr.mxu0 0.0
    %311 = vmatpush1.msra.mxu0 0.0
    %312 = vmatprep.subr.mxu0 0.0
    %313 = vmatpush1.msra.mxu0 0.0
    %314 = vmatprep.mubr.f32.mxu0 0.0
    %315 = vmatmul.mubr.f32.gmra.mrb[0].mxu0 %v227
    %v316 = vpop.f32.mrb[0].mxu0
    %v317 = vadd.f32 %v188, %v316
    %v318 = vpop.f32.mrb[0].mxu0
    %319 = vmatprep.mubr.f32.mxu0 0.0
    %320 = vmatmul.mubr.f32.gmra.mrb[0].mxu0 %v230
    %v321 = vpop.f32.mrb[0].mxu0
    %v322 = vadd.f32 %v193, %v321
    %v323 = vpop.f32.mrb[0].mxu0
    %324 = vmatprep.mubr.f32.mxu0 0.0
    %325 = vmatmul.mubr.f32.gmra.mrb[0].mxu0 %v233
    %v326 = vpop.f32.mrb[0].mxu0
    %v327 = vadd.f32 %v198, %v326
    %v328 = vpop.f32.mrb[0].mxu0
    %329 = vmatprep.mubr.f32.mxu0 0.0
    %330 = vmatmul.mubr.f32.gmra.mrb[0].mxu0 %v236
    %v331 = vpop.f32.mrb[0].mxu0
    %v332 = vadd.f32 %v203, %v331
    %v333 = vpop.f32.mrb[0].mxu0
    %334 = vmatprep.mubr.f32.mxu0 0.0
    %335 = vmatmul.mubr.f32.gmra.mrb[0].mxu0 %v239
    %v336 = vpop.f32.mrb[0].mxu0
    %v337 = vadd.f32 %v208, %v336
    %v338 = vpop.f32.mrb[0].mxu0
    %339 = vmatprep.mubr.f32.mxu0 0.0
    %340 = vmatmul.mubr.f32.gmra.mrb[0].mxu0 %v242
    %v341 = vpop.f32.mrb[0].mxu0
    %v342 = vadd.f32 %v213, %v341
    %v343 = vpop.f32.mrb[0].mxu0
    %344 = vmatprep.mubr.f32.mxu0 0.0
    %345 = vmatmul.mubr.f32.gmra.mrb[0].mxu0 %v245
    %v346 = vpop.f32.mrb[0].mxu0
    %v347 = vadd.f32 %v218, %v346
    %v348 = vpop.f32.mrb[0].mxu0
    %349 = vmatprep.mubr.f32.mxu0 0.0
    %350 = vmatmul.mubr.f32.gmra.mrb[0].mxu0 %v248
    %v351 = vpop.f32.mrb[0].mxu0
    %v352 = vadd.f32 %v223, %v351
    %v353 = vpop.f32.mrb[0].mxu0
    %354 = vdwg.mxu0
    %v355 = vmax.f32 %v317, 0.0
    %v356 = vmax.f32 %v322, 0.0
    %v357 = vmax.f32 %v327, 0.0
    %v358 = vmax.f32 %v332, 0.0
    %v359 = vmax.f32 %v337, 0.0
    %v360 = vmax.f32 %v342, 0.0
    %v361 = vmax.f32 %v347, 0.0
    %v362 = vmax.f32 %v352, 0.0
    %v363 = vld [vmem:[%s5] sm:$0xff]
    %v364 = vld [vmem:[%s5 + $0x8] sm:$0xff]
    %v365 = vld [vmem:[%s5 + $0x10] sm:$0xff]
    %v366 = vld [vmem:[%s5 + $0x18] sm:$0xff]
    %v367 = vld [vmem:[%s6] sm:$0xff]
    %v368 = vld [vmem:[%s6 + $0x8] sm:$0xff]
    %v369 = vld [vmem:[%s6 + $0x10] sm:$0xff]
    %v370 = vld [vmem:[%s6 + $0x18] sm:$0xff]
    %372 = vset.pattern.permute.xlu0 0
    %373 = vperm.xlu0 %372, %v367
    %v374 = vpop.permute.xlu0 %373
    %377 = vset.pattern.permute.xlu0 0
    %378 = vperm.xlu0 %377, %v368
    %v379 = vpop.permute.xlu0 %378
    %382 = vset.pattern.permute.xlu0 0
    %383 = vperm.xlu0 %382, %v369
    %v384 = vpop.permute.xlu0 %383
    %387 = vset.pattern.permute.xlu0 0
    %388 = vperm.xlu0 %387, %v370
    %v389 = vpop.permute.xlu0 %388
    %vm391 = vcmask 523264
    %v393 = vsel %vm391, %v363, 0
    %v396 = vsel %vm391, %v364, 0
    %v399 = vsel %vm391, %v365, 0
    %v402 = vsel %vm391, %v366, 0
    %404 = vmatprep.subr.mxu0 0.0
    %405 = vmatpush1.msra.mxu0 %v355
    %406 = vmatprep.subr.mxu0 0.0
    %407 = vmatpush1.msra.mxu0 %v356
    %408 = vmatprep.subr.mxu0 0.0
    %409 = vmatpush1.msra.mxu0 %v357
    %410 = vmatprep.subr.mxu0 0.0
    %411 = vmatpush1.msra.mxu0 %v358
    %412 = vmatprep.subr.mxu0 0.0
    %413 = vmatpush1.msra.mxu0 %v359
    %414 = vmatprep.subr.mxu0 0.0
    %415 = vmatpush1.msra.mxu0 %v360
    %416 = vmatprep.subr.mxu0 0.0
    %417 = vmatpush1.msra.mxu0 %v361
    %418 = vmatprep.subr.mxu0 0.0
    %419 = vmatpush1.msra.mxu0 %v362
    %420 = vmatprep.subr.mxu0 0.0
    %421 = vmatpush1.msra.mxu0 0.0
    %422 = vmatprep.subr.mxu0 0.0
    %423 = vmatpush1.msra.mxu0 0.0
    %424 = vmatprep.subr.mxu0 0.0
    %425 = vmatpush1.msra.mxu0 0.0
    %426 = vmatprep.subr.mxu0 0.0
    %427 = vmatpush1.msra.mxu0 0.0
    %428 = vmatprep.subr.mxu0 0.0
    %429 = vmatpush1.msra.mxu0 0.0
    %430 = vmatprep.subr.mxu0 0.0
    %431 = vmatpush1.msra.mxu0 0.0
    %432 = vmatprep.subr.mxu0 0.0
    %433 = vmatpush1.msra.mxu0 0.0
    %434 = vmatprep.subr.mxu0 0.0
    %435 = vmatpush1.msra.mxu0 0.0
    %436 = vmatprep.subr.mxu0 0.0
    %437 = vmatpush1.msra.mxu0 0.0
    %438 = vmatprep.subr.mxu0 0.0
    %439 = vmatpush1.msra.mxu0 0.0
    %440 = vmatprep.subr.mxu0 0.0
    %441 = vmatpush1.msra.mxu0 0.0
    %442 = vmatprep.subr.mxu0 0.0
    %443 = vmatpush1.msra.mxu0 0.0
    %444 = vmatprep.subr.mxu0 0.0
    %445 = vmatpush1.msra.mxu0 0.0
    %446 = vmatprep.subr.mxu0 0.0
    %447 = vmatpush1.msra.mxu0 0.0
    %448 = vmatprep.subr.mxu0 0.0
    %449 = vmatpush1.msra.mxu0 0.0
    %450 = vmatprep.subr.mxu0 0.0
    %451 = vmatpush1.msra.mxu0 0.0
    %452 = vmatprep.subr.mxu0 0.0
    %453 = vmatpush1.msra.mxu0 0.0
    %454 = vmatprep.subr.mxu0 0.0
    %455 = vmatpush1.msra.mxu0 0.0
    %456 = vmatprep.subr.mxu0 0.0
    %457 = vmatpush1.msra.mxu0 0.0
    %458 = vmatprep.subr.mxu0 0.0
    %459 = vmatpush1.msra.mxu0 0.0
    %460 = vmatprep.subr.mxu0 0.0
    %461 = vmatpush1.msra.mxu0 0.0
    %462 = vmatprep.subr.mxu0 0.0
    %463 = vmatpush1.msra.mxu0 0.0
    %464 = vmatprep.subr.mxu0 0.0
    %465 = vmatpush1.msra.mxu0 0.0
    %466 = vmatprep.subr.mxu0 0.0
    %467 = vmatpush1.msra.mxu0 0.0
    %468 = vmatprep.mubr.f32.mxu0 0.0
    %469 = vmatmul.mubr.f32.gmra.mrb[0].mxu0 %v393
    %v470 = vpop.f32.mrb[0].mxu0
    %v471 = vadd.f32 %v374, %v470
    %v472 = vpop.f32.mrb[0].mxu0
    %473 = vmatprep.mubr.f32.mxu0 0.0
    %474 = vmatmul.mubr.f32.gmra.mrb[0].mxu0 %v396
    %v475 = vpop.f32.mrb[0].mxu0
    %v476 = vadd.f32 %v379, %v475
    %v477 = vpop.f32.mrb[0].mxu0
    %478 = vmatprep.mubr.f32.mxu0 0.0
    %479 = vmatmul.mubr.f32.gmra.mrb[0].mxu0 %v399
    %v480 = vpop.f32.mrb[0].mxu0
    %v481 = vadd.f32 %v384, %v480
    %v482 = vpop.f32.mrb[0].mxu0
    %483 = vmatprep.mubr.f32.mxu0 0.0
    %484 = vmatmul.mubr.f32.gmra.mrb[0].mxu0 %v402
    %v485 = vpop.f32.mrb[0].mxu0
    %v486 = vadd.f32 %v389, %v485
    %v487 = vpop.f32.mrb[0].mxu0
    %488 = vdwg.mxu0
    %v489 = vmax.f32 %v471, 0.0
    %v490 = vmax.f32 %v476, 0.0
    %v491 = vmax.f32 %v481, 0.0
    %v492 = vmax.f32 %v486, 0.0
    %v493 = vld [vmem:[%s7] sm:$0x7]
    %v494 = vld [vmem:[%s8] sm:$0x7]
    %496 = vset.pattern.permute.xlu0 0
    %497 = vperm.xlu0 %496, %v494
    %v498 = vpop.permute.xlu0 %497
    %v501 = vsel %vm225, %v493, 0
    %503 = vmatprep.subr.mxu0 0.0
    %504 = vmatpush1.msra.mxu0 %v489
    %505 = vmatprep.subr.mxu0 0.0
    %506 = vmatpush1.msra.mxu0 %v490
    %507 = vmatprep.subr.mxu0 0.0
    %508 = vmatpush1.msra.mxu0 %v491
    %509 = vmatprep.subr.mxu0 0.0
    %510 = vmatpush1.msra.mxu0 %v492
    %511 = vmatprep.subr.mxu0 0.0
    %512 = vmatpush1.msra.mxu0 0.0
    %513 = vmatprep.subr.mxu0 0.0
    %514 = vmatpush1.msra.mxu0 0.0
    %515 = vmatprep.subr.mxu0 0.0
    %516 = vmatpush1.msra.mxu0 0.0
    %517 = vmatprep.subr.mxu0 0.0
    %518 = vmatpush1.msra.mxu0 0.0
    %519 = vmatprep.subr.mxu0 0.0
    %520 = vmatpush1.msra.mxu0 0.0
    %521 = vmatprep.subr.mxu0 0.0
    %522 = vmatpush1.msra.mxu0 0.0
    %523 = vmatprep.subr.mxu0 0.0
    %524 = vmatpush1.msra.mxu0 0.0
    %525 = vmatprep.subr.mxu0 0.0
    %526 = vmatpush1.msra.mxu0 0.0
    %527 = vmatprep.subr.mxu0 0.0
    %528 = vmatpush1.msra.mxu0 0.0
    %529 = vmatprep.subr.mxu0 0.0
    %530 = vmatpush1.msra.mxu0 0.0
    %531 = vmatprep.subr.mxu0 0.0
    %532 = vmatpush1.msra.mxu0 0.0
    %533 = vmatprep.subr.mxu0 0.0
    %534 = vmatpush1.msra.mxu0 0.0
    %535 = vmatprep.subr.mxu0 0.0
    %536 = vmatpush1.msra.mxu0 0.0
    %537 = vmatprep.subr.mxu0 0.0
    %538 = vmatpush1.msra.mxu0 0.0
    %539 = vmatprep.subr.mxu0 0.0
    %540 = vmatpush1.msra.mxu0 0.0
    %541 = vmatprep.subr.mxu0 0.0
    %542 = vmatpush1.msra.mxu0 0.0
    %543 = vmatprep.subr.mxu0 0.0
    %544 = vmatpush1.msra.mxu0 0.0
    %545 = vmatprep.subr.mxu0 0.0
    %546 = vmatpush1.msra.mxu0 0.0
    %547 = vmatprep.subr.mxu0 0.0
    %548 = vmatpush1.msra.mxu0 0.0
    %549 = vmatprep.subr.mxu0 0.0
    %550 = vmatpush1.msra.mxu0 0.0
    %551 = vmatprep.subr.mxu0 0.0
    %552 = vmatpush1.msra.mxu0 0.0
    %553 = vmatprep.subr.mxu0 0.0
    %554 = vmatpush1.msra.mxu0 0.0
    %555 = vmatprep.subr.mxu0 0.0
    %556 = vmatpush1.msra.mxu0 0.0
    %557 = vmatprep.subr.mxu0 0.0
    %558 = vmatpush1.msra.mxu0 0.0
    %559 = vmatprep.subr.mxu0 0.0
    %560 = vmatpush1.msra.mxu0 0.0
    %561 = vmatprep.subr.mxu0 0.0
    %562 = vmatpush1.msra.mxu0 0.0
    %563 = vmatprep.subr.mxu0 0.0
    %564 = vmatpush1.msra.mxu0 0.0
    %565 = vmatprep.subr.mxu0 0.0
    %566 = vmatpush1.msra.mxu0 0.0
    %567 = vmatprep.mubr.f32.mxu0 0.0
    %568 = vmatmul.mubr.f32.gmra.mrb[0].mxu0 %v501
    %v569 = vpop.f32.mrb[0].mxu0
    %v570 = vadd.f32 %v498, %v569
    %v571 = vpop.f32.mrb[0].mxu0
    %572 = vdwg.mxu0
    %v574 = vrot.slane %v570, 1
    %v576 = vmax.f32 %v570, %v574
    %v577 = vrot.slane %v570, 2
    %v579 = vmax.f32 %v576, %v577
    %v580 = vlaneseq
    %v581 = vshrl.u32 %v580, 7
    %v582 = vsub.s32 0, %v581
    %v583 = vrot.slane %v579, %v582
    %v584 = vsub.f32 %v570, %v583
    %v585 = vmul.f32 %v584, 1.442695
    %v586 = vpow.pop %v585
    %v588 = vrot.slane %v586, 1
    %v590 = vadd.f32 %v586, %v588
    %v591 = vrot.slane %v586, 2
    %v593 = vadd.f32 %v590, %v591
    %v594 = vlaneseq
    %v595 = vshrl.u32 %v594, 7
    %v596 = vsub.s32 0, %v595
    %v597 = vrot.slane %v593, %v596
    %v598 = vrcp.pop %v597
    %v599 = vmul.f32 %v586, %v598
    %600 = vst [vmem:[#allocation2] sm:$0x7] %v599
    // Predicated region
    $region38: #{tpu_custom_call.1} parent=1 // pred_check
      _
    $region39: #{tpu_custom_call.1} parent=1 // pred_check_branch
      %602 = sbr.rel (0) target = $region41
    $region40: #{tpu_custom_call.1} parent=1 // pred_region
      %s604 = ssub.s32 64, 64
      %605 = vsyncadd [#allocation3], %s604
      %s607 = sshll.u32 [#allocation2], 4
      %s608 = int_to_ptr.vmem [resolvable:$true] %s607
      %610 = dma.vmem_to_hbm [thread:$0]  %s608, 64, %s9, [#allocation3]
    $region41: #{tpu_custom_call.1} parent=1 // pred_fallthru
      _
    // Predicated region
    $region42: #{tpu_custom_call.1} parent=1 // pred_check
      _
    $region43: #{tpu_custom_call.1} parent=1 // pred_check_branch
      %612 = sbr.rel (0) target = $region45
    $region44: #{tpu_custom_call.1} parent=1 // pred_region
      %613 = dma.done [#allocation3], 64
    $region45: #{tpu_custom_call.1} parent=1 // pred_fallthru
      _
    %614 = vsyncpa [#allocation3], 1

</llo_original>
